<compile_context>
chip_gen: v6e
topology: v6e:2x2x1
jax: 0.10.0
libtpu: 0.0.40
codegen_flags: <defaults>
</compile_context>

<pallas_src>
import jax
import jax.numpy as jnp
from jax.experimental import pallas as pl
from jax.experimental.pallas import tpu as pltpu


def _round_up(a, m):
    return ((a + m - 1) // m) * m


def _cdiv(a, b):
    return (a + b - 1) // b


def _min_sublane_rows(dtype):
    itemsize = jnp.dtype(dtype).itemsize
    if itemsize >= 4:
        return 8
    if itemsize == 2:
        return 16
    return 32


def _default_target_tile_bytes():
    # Per-generation x-tile budget. Double-buffered this stays under each
    # chip's *default* scoped-VMEM limit (v5e 16 MiB, v6e/v7x 32 MiB).
    try:
        kind = jax.devices()[0].device_kind.lower()
    except Exception:
        kind = ""
    if "v6" in kind or "v7" in kind or "7x" in kind:
        return 8 * 1024 * 1024
    return 4 * 1024 * 1024  # v5e / unknown: conservative


def _make_linear_kernel(d_total, td, mask_d_tail):
    def kernel(x_ref, w_ref, b_ref, o_ref, acc_ref):
        # x_ref: (tb, td) VMEM tile (pipelined), w_ref: (1, td) VMEM,
        # b_ref: (1,) SMEM scalar, o_ref: (tb, 1), acc_ref: (tb, 1) f32 scratch.
        k = pl.program_id(1)

        @pl.when(k == 0)
        def _init():
            acc_ref[...] = jnp.zeros_like(acc_ref)

        x = x_ref[...]
        w = w_ref[...]
        if mask_d_tail:
            # Last D block is ragged: zero out the out-of-range lanes of both
            # operands so unspecified tail data cannot pollute the reduction.
            col = jax.lax.broadcasted_iota(jnp.int32, (1, td), 1)
            valid = col < (d_total - k * td)
            x = jnp.where(valid, x, jnp.zeros_like(x))
            w = jnp.where(valid, w, jnp.zeros_like(w))

        # (tb, td) x (1, td) contracted on td -> (tb, 1), f32 accumulation.
        acc_ref[...] += jax.lax.dot_general(
            x, w,
            dimension_numbers=(((1,), (1,)), ((), ())),
            preferred_element_type=jnp.float32,
            precision=jax.lax.Precision.HIGHEST)

        @pl.when(k == pl.num_programs(1) - 1)
        def _finalize():
            o_ref[...] = (acc_ref[...] + b_ref[0]).astype(o_ref.dtype)

    return kernel


def simple_regression_forward(x, weight, bias, *, target_tile_bytes=None,
                              min_pallas_bytes=2 * 1024 * 1024,
                              force_pallas=False):
    """x: (B, D), weight: (1, D) (nn.Linear layout), bias: (1,) -> (B, 1)."""
    B, D = x.shape
    weight = weight.reshape(1, D)
    bias = bias.reshape(1,).astype(jnp.float32)   # SMEM scalar, f32 accumulation
    itemsize = jnp.dtype(x.dtype).itemsize

    # Tiny shapes: pallas_call fixed overhead dominates -> plain XLA matvec.
    if not force_pallas and B * D * itemsize < min_pallas_bytes:
        out = jnp.dot(x, weight.T, preferred_element_type=jnp.float32,
                      precision=jax.lax.Precision.HIGHEST)
        return (out + bias).astype(x.dtype)

    if target_tile_bytes is None:
        target_tile_bytes = _default_target_tile_bytes()

    min_rows = _min_sublane_rows(x.dtype)

    # VMEM footprint of a (tb, D) block may be lane-padded to a multiple of
    # 128, so budget with the padded row size (conservative for small D).
    bytes_per_row_vmem = _round_up(D, 128) * itemsize
    tb = (target_tile_bytes // bytes_per_row_vmem) // min_rows * min_rows

    if tb >= min_rows:
        td = D
        tb = min(tb, _round_up(B, min_rows))
        # Whole batch in one tile: split so a 2-TC chip (v7x) keeps both
        # TensorCores busy on the "parallel" batch axis.
        if _cdiv(B, tb) == 1 and B > min_rows:
            tb = _round_up(_cdiv(B, 2), min_rows)
    else:
        # Very large D: tile the reduction dimension instead of shrinking the
        # batch tile to min_rows (which would be per-step-overhead bound).
        tb = min(min_rows * 16, _round_up(B, min_rows))
        td = max(128, (target_tile_bytes // (tb * itemsize)) // 128 * 128)
        td = min(td, _round_up(D, 128))

    nb = _cdiv(B, tb)
    nd = _cdiv(D, td)
    mask_d_tail = (td != D) and (D % td != 0)

    kernel = _make_linear_kernel(D, td, mask_d_tail)

    cost = pl.CostEstimate(
        flops=2 * B * D,
        transcendentals=0,
        bytes_accessed=(B * D + D + B + 1) * itemsize)

    out = pl.pallas_call(
        kernel,
        out_shape=jax.ShapeDtypeStruct((B, 1), x.dtype),
        grid_spec=pltpu.PrefetchScalarGridSpec(
            num_scalar_prefetch=0,
            grid=(nb, nd),
            in_specs=[
                pl.BlockSpec((tb, td), lambda i, k: (i, k)),         # x: tiled
                pl.BlockSpec((1, td), lambda i, k: (0, k)),          # weight
                pl.BlockSpec(memory_space=pltpu.MemorySpace.SMEM),   # bias
            ],
            out_specs=pl.BlockSpec((tb, 1), lambda i, k: (i, 0)),
            scratch_shapes=[pltpu.VMEM((tb, 1), jnp.float32)],
        ),
        compiler_params=pltpu.CompilerParams(
            dimension_semantics=("parallel", "arbitrary")),
        cost_estimate=cost,
    )(x, weight, bias)

    return out


if __name__ == "__main__":
    key = jax.random.PRNGKey(0)
    kx, kw, kb = jax.random.split(key, 3)

    batch, input_dim = 200, 160     # ragged vs both tile sizes and vs 128 lanes
    x = jax.random.normal(kx, (batch, input_dim), dtype=jnp.float32)

    bound = 1.0 / jnp.sqrt(jnp.float32(input_dim))
    weight = jax.random.uniform(kw, (1, input_dim), dtype=jnp.float32,
                                minval=-bound, maxval=bound)
    bias = jax.random.uniform(kb, (1,), dtype=jnp.float32,
                              minval=-bound, maxval=bound)

    ref = jnp.dot(x, weight.T, precision=jax.lax.Precision.HIGHEST) + bias

    # 1) Tiny-shape XLA dispatch path.
    out_small = simple_regression_forward(x[:8, :32], weight[:, :32], bias)
    out_small = jax.block_until_ready(out_small)
    ref_small = jnp.dot(x[:8, :32], weight[:, :32].T,
                        precision=jax.lax.Precision.HIGHEST) + bias
    assert out_small.shape == (8, 1)
    assert jnp.allclose(out_small, ref_small, atol=1e-4, rtol=1e-4)

    # 2) Pallas path: batch-tiled grid with a ragged last batch block (nd=1).
    out_b = simple_regression_forward(x, weight, bias, force_pallas=True,
                                      target_tile_bytes=64 * 1024)
    out_b = jax.block_until_ready(out_b)
    assert out_b.shape == (batch, 1)
    assert jnp.allclose(out_b, ref, atol=1e-4, rtol=1e-4)

    # 3) Pallas path: D-tiled reduction axis with masked ragged D tail.
    out_d = simple_regression_forward(x, weight, bias, force_pallas=True,
                                      target_tile_bytes=4096)
    out_d = jax.block_until_ready(out_d)
    assert out_d.shape == (batch, 1)
    assert jnp.allclose(out_d, ref, atol=1e-4, rtol=1e-4)

    print("KERNEL_OK")
</pallas_src>

<mosaic_0001>
module attributes {stable_mosaic.version = 11 : i64} {
  func.func @kernel(%arg0: i32, %arg1: i32, %arg2: memref<64x160xf32, #tpu.memory_space<vmem>>, %arg3: memref<1x160xf32, #tpu.memory_space<vmem>>, %arg4: memref<1xf32, #tpu.memory_space<smem>>, %arg5: memref<64x1xf32, #tpu.memory_space<vmem>>, %arg6: memref<64x1xf32, #tpu.memory_space<vmem>>) attributes {dimension_semantics = [#tpu.dimension_semantics<parallel>, #tpu.dimension_semantics<arbitrary>], iteration_bounds = array<i64: 4, 1>, scalar_prefetch = 0 : i64, scratch_operands = 1 : i64, tpu.core_type = #tpu.core_type<tc>, window_params = [{transform_indices = @transform_0, window_bounds = array<i64: 64, 160>}, {transform_indices = @transform_1, window_bounds = array<i64: 1, 160>}, {transform_indices = @transform_2, window_bounds = array<i64: 1>}, {transform_indices = @transform_3, window_bounds = array<i64: 64, 1>}]} {
    %c0_i32 = arith.constant 0 : i32
    %0 = arith.cmpi eq, %arg1, %c0_i32 : i32
    %1 = arith.extui %0 : i1 to i32
    %c0_i32_0 = arith.constant 0 : i32
    %2 = arith.cmpi ne, %1, %c0_i32_0 : i32
    scf.if %2 {
      %cst_10 = arith.constant 0.000000e+00 : f32
      %12 = vector.broadcast %cst_10 : f32 to vector<64x1xf32>
      %c0_11 = arith.constant 0 : index
      %c0_12 = arith.constant 0 : index
      %13 = vector.load %arg6[%c0_11, %c0_12] : memref<64x1xf32, #tpu.memory_space<vmem>>, vector<64x1xf32>
      tpu.vector_store %arg6[%c0_11, %c0_12], %12 {strides = array<i32>} : memref<64x1xf32, #tpu.memory_space<vmem>>, vector<64x1xf32>,
    } else {
    }
    %c0 = arith.constant 0 : index
    %c0_1 = arith.constant 0 : index
    %3 = vector.load %arg2[%c0, %c0_1] : memref<64x160xf32, #tpu.memory_space<vmem>>, vector<64x160xf32>
    %c0_2 = arith.constant 0 : index
    %c0_3 = arith.constant 0 : index
    %4 = vector.load %arg3[%c0_2, %c0_3] : memref<1x160xf32, #tpu.memory_space<vmem>>, vector<1x160xf32>
    %c0_4 = arith.constant 0 : index
    %c0_5 = arith.constant 0 : index
    %5 = vector.load %arg6[%c0_4, %c0_5] : memref<64x1xf32, #tpu.memory_space<vmem>>, vector<64x1xf32>
    %cst = arith.constant dense<0.000000e+00> : vector<64x1xf32>
    %6 = tpu.matmul %3, %4, %cst {dimension_numbers = #tpu.dot_dimension_numbers<[1], [1], [0], [0], [0, 0, 1, 0], [], []>, precision = #tpu.contract_precision<fp32>} : vector<64x160xf32>, vector<1x160xf32>, vector<64x1xf32> -> vector<64x1xf32>
    %7 = arith.addf %5, %6 : vector<64x1xf32>
    %c0_6 = arith.constant 0 : index
    %c0_7 = arith.constant 0 : index
    %8 = vector.load %arg6[%c0_6, %c0_7] : memref<64x1xf32, #tpu.memory_space<vmem>>, vector<64x1xf32>
    tpu.vector_store %arg6[%c0_6, %c0_7], %7 {strides = array<i32>} : memref<64x1xf32, #tpu.memory_space<vmem>>, vector<64x1xf32>,
    %c0_i32_8 = arith.constant 0 : i32
    %9 = arith.cmpi eq, %arg1, %c0_i32_8 : i32
    %10 = arith.extui %9 : i1 to i32
    %c0_i32_9 = arith.constant 0 : i32
    %11 = arith.cmpi ne, %10, %c0_i32_9 : i32
    scf.if %11 {
      %c0_10 = arith.constant 0 : index
      %c0_11 = arith.constant 0 : index
      %12 = vector.load %arg6[%c0_10, %c0_11] : memref<64x1xf32, #tpu.memory_space<vmem>>, vector<64x1xf32>
      %c0_12 = arith.constant 0 : index
      %13 = memref.load %arg4[%c0_12] : memref<1xf32, #tpu.memory_space<smem>>
      %14 = vector.broadcast %13 : f32 to vector<64x1xf32>
      %15 = arith.addf %12, %14 : vector<64x1xf32>
      %c0_13 = arith.constant 0 : index
      %c0_14 = arith.constant 0 : index
      %16 = vector.load %arg5[%c0_13, %c0_14] : memref<64x1xf32, #tpu.memory_space<vmem>>, vector<64x1xf32>
      tpu.vector_store %arg5[%c0_13, %c0_14], %15 {strides = array<i32>} : memref<64x1xf32, #tpu.memory_space<vmem>>, vector<64x1xf32>,
    } else {
    }
    return
  }
  func.func @transform_0(%arg0: i32, %arg1: i32) -> (i32, i32) {
    %c0_i32 = arith.constant 0 : i32
    return %arg0, %arg1 : i32, i32
  }
  func.func @transform_1(%arg0: i32, %arg1: i32) -> (i32, i32) {
    %c0_i32 = arith.constant 0 : i32
    %c0_i32_0 = arith.constant 0 : i32
    return %c0_i32, %arg1 : i32, i32
  }
  func.func @transform_2(%arg0: i32, %arg1: i32) -> i32 {
    %c0_i32 = arith.constant 0 : i32
    %c0_i32_0 = arith.constant 0 : i32
    return %c0_i32 : i32
  }
  func.func @transform_3(%arg0: i32, %arg1: i32) -> (i32, i32) {
    %c0_i32 = arith.constant 0 : i32
    %c0_i32_0 = arith.constant 0 : i32
    return %arg0, %c0_i32 : i32, i32
  }
}

</mosaic_0001>

<llo_original>
// kernel: tpu_custom_call.1
$region0: #{tpu_custom_call.1}
  #allocation0 [shape = 'u32[]', space=smem, size = 0x4, offset = 0x4, fixed_abs, tag = 'smem constant byte address 0x4 - core index']
  #allocation1 [shape = 'u32[144,128]{1,0:T(1,128)}', space=vmem, size = 0x12000, scoped, tag = 'internal scratch']
  #allocation2 [shape = 'f32[64,1]{1,0:T(8,128)}', space=vmem, size = 0x8000, scoped, tag = 'scratch operand']
  #allocation3 [shape = 'f32[1]{0:T(128)S(6)}', space=smem, size = 0x200, scoped, tag = 'scoped memory for tpu_custom_call.1']
  %s0 = inlined_call_operand.vmem [shape: f32[200,160], index: 0, kind: input, shape index: {}]
  %s1 = inlined_call_operand.vmem [shape: f32[1,160], index: 1, kind: input, shape index: {}]
  %s2 = inlined_call_operand.<no memory space> [shape: f32[1], index: 2, kind: input, shape index: {}]
  %s3 = inlined_call_operand.vmem [shape: f32[200,1], index: 3, kind: output, shape index: {}]
  %s4 = sld [smem:[#allocation0]]
  $region101: #{tpu_custom_call.1} parent=0
    _
  %s6 = ssub.s32 1, %s4
  %s7 = scalar_select 0, %s6, %s4
  %8 = sst [smem:[#allocation3]] %s2
  $region1: #{tpu_custom_call.1} parent=0
    #allocation4 [shape = 'u8[65536]{0}', space=vmem, size = 0x10000, scoped, tag = 'output window, operand 0']
    loop: start=0, step=1, limit=6
    $region2: #{tpu_custom_call.1} parent=1 // loop_pre_header
      _
    $region3: #{tpu_custom_call.1} parent=1 // loop_header
      %s10 = sphi 0, %s14
      %p11 = scmp.ge.s32.totalorder %s10, 6
      %s17 = sphi 0, %s29
      %s18 = sphi 0, %s25
      %s19 = sphi 0, %s17
      %s20 = sphi 0, %s18
      %s21 = sphi 0, %s19
      %s22 = sphi 0, %s20
      %s34 = sphi 0, %s36
      %s37 = sphi 0, %s34
      %s38 = sphi 0, %s37
      %s54 = sphi 0, %s38
      %s60 = sphi 0, %s62
      %s63 = sphi 0, %s60
      %s64 = sphi 0, %s63
      %s80 = sphi 0, %s64
      %s84 = sphi 0, %s84
      %s86 = sphi 0, %s84
      %s87 = sphi 0, %s86
      %s101 = sphi 0, %s87
      %s107 = sphi 0, %s109
      %s110 = sphi 0, %s107
      %s111 = sphi 0, %s110
      %s127 = sphi 0, %s111
    $region4: #{tpu_custom_call.1} parent=1 // loop_header_branch
      %13 = sbr.rel (%p11) target = $region8
    $region5: #{tpu_custom_call.1} parent=1 // loop_body
      %s15 = ssub.s32 %s10, 1
      %s16 = ssub.s32 %s10, 2
      %s23 = sadd.s32 1, %s18
      %p24 = scmp.ge.s32.totalorder %s23, 1
      %s25 = scalar_select %p24, 0, %s23
      %s26 = sadd.s32 1, %s17
      %s27 = scalar_select %p24, %s26, %s17
      %p28 = scmp.ge.s32.totalorder %s27, 4
      %s29 = scalar_select %p28, 0, %s27
      %s30 = ssub.s32 %s17, %s29
      %s31 = ssub.s32 %s18, %s25
      %s32 = sor.u32 %s30, %s31
      %p33 = scmp.eq.s32.totalorder %s32, 0
      %s35 = sadd.s32 %s34, 1
      %s36 = scalar_select %p33, %s34, %s35
      %p39 = pneg %p33
      %p40 = scmp.eq.s32.totalorder %s10, 3
      %p41 = por %p39, %p40
      %p42 = scmp.ne.s32.totalorder %s34, %s37
      %p43 = scmp.eq.s32.totalorder %s10, 0
      %p44 = por %p42, %p43
      %p45 = scmp.ne.s32.totalorder %s34, %s37
      %p46 = scmp.eq.s32.totalorder %s15, 3
      %p47 = por %p45, %p46
      %p48 = scmp.ne.s32.totalorder %s37, %s38
      %p49 = scmp.eq.s32.totalorder %s15, 0
      %p50 = por %p48, %p49
      %p51 = scmp.ne.s32.totalorder %s37, %s38
      %p52 = scmp.eq.s32.totalorder %s16, 3
      %p53 = por %p51, %p52
      %p55 = scmp.ne.s32.totalorder %s38, %s54
      %p56 = scmp.eq.s32.totalorder %s16, 0
      %p57 = por %p55, %p56
      %s58 = ssub.s32 %s18, %s25
      %p59 = scmp.eq.s32.totalorder %s58, 0
      %s61 = sadd.s32 %s60, 1
      %s62 = scalar_select %p59, %s60, %s61
      %p65 = pneg %p59
      %p66 = scmp.eq.s32.totalorder %s10, 3
      %p67 = por %p65, %p66
      %p68 = scmp.ne.s32.totalorder %s60, %s63
      %p69 = scmp.eq.s32.totalorder %s10, 0
      %p70 = por %p68, %p69
      %p71 = scmp.ne.s32.totalorder %s60, %s63
      %p72 = scmp.eq.s32.totalorder %s15, 3
      %p73 = por %p71, %p72
      %p74 = scmp.ne.s32.totalorder %s63, %s64
      %p75 = scmp.eq.s32.totalorder %s15, 0
      %p76 = por %p74, %p75
      %p77 = scmp.ne.s32.totalorder %s63, %s64
      %p78 = scmp.eq.s32.totalorder %s16, 3
      %p79 = por %p77, %p78
      %p81 = scmp.ne.s32.totalorder %s64, %s80
      %p82 = scmp.eq.s32.totalorder %s16, 0
      %p83 = por %p81, %p82
      %s85 = sadd.s32 %s84, 1
      %p88 = scmp.eq.s32.totalorder %s10, 3
      %p89 = scmp.ne.s32.totalorder %s84, %s86
      %p90 = scmp.eq.s32.totalorder %s10, 0
      %p91 = por %p89, %p90
      %p92 = scmp.ne.s32.totalorder %s84, %s86
      %p93 = scmp.eq.s32.totalorder %s15, 3
      %p94 = por %p92, %p93
      %p95 = scmp.ne.s32.totalorder %s86, %s87
      %p96 = scmp.eq.s32.totalorder %s15, 0
      %p97 = por %p95, %p96
      %p98 = scmp.ne.s32.totalorder %s86, %s87
      %p99 = scmp.eq.s32.totalorder %s16, 3
      %p100 = por %p98, %p99
      %p102 = scmp.ne.s32.totalorder %s87, %s101
      %p103 = scmp.eq.s32.totalorder %s16, 0
      %p104 = por %p102, %p103
      %s105 = ssub.s32 %s17, %s29
      %p106 = scmp.eq.s32.totalorder %s105, 0
      %s108 = sadd.s32 %s107, 1
      %s109 = scalar_select %p106, %s107, %s108
      %p112 = pneg %p106
      %p113 = scmp.eq.s32.totalorder %s10, 3
      %p114 = por %p112, %p113
      %p115 = scmp.ne.s32.totalorder %s107, %s110
      %p116 = scmp.eq.s32.totalorder %s10, 0
      %p117 = por %p115, %p116
      %p118 = scmp.ne.s32.totalorder %s107, %s110
      %p119 = scmp.eq.s32.totalorder %s15, 3
      %p120 = por %p118, %p119
      %p121 = scmp.ne.s32.totalorder %s110, %s111
      %p122 = scmp.eq.s32.totalorder %s15, 0
      %p123 = por %p121, %p122
      %p124 = scmp.ne.s32.totalorder %s110, %s111
      %p125 = scmp.eq.s32.totalorder %s16, 3
      %p126 = por %p124, %p125
      %p128 = scmp.ne.s32.totalorder %s111, %s127
      %p129 = scmp.eq.s32.totalorder %s16, 0
      %p130 = por %p128, %p129
      %p131 = scmp.le.s32.totalorder 1, %s10
      %p132 = scmp.lt.s32.totalorder %s10, 5
      %p133 = pnand %p131, %p132
      %p134 = pneg %p133
      // Predicated region
      $region9: #{tpu_custom_call.1} parent=5 // pred_check
        _
      $region10: #{tpu_custom_call.1} parent=5 // pred_check_branch
        %136 = sbr.rel (%p133) target = $region12
      $region11: #{tpu_custom_call.1} parent=5 // pred_region
        %s137 = ssub.s32 %s10, 1
        // Predicated region
        $region13: #{tpu_custom_call.1} parent=11 // pred_check
          %p138 = pneg %p76
        $region14: #{tpu_custom_call.1} parent=11 // pred_check_branch
          %140 = sbr.rel (%p138) target = $region16
        $region15: #{tpu_custom_call.1} parent=11 // pred_region
          %s141 = smul.u32 2, %s20
          %p142 = scmp.lt.s32.totalorder %s141, 1
          %s143 = scalar_select %p142, %s141, 1
          %s144 = scalar_lea.vmem %s1, %s143
          %s145 = smul.u32 2, %s20
        $region16: #{tpu_custom_call.1} parent=11 // pred_fallthru
          _
        // Predicated region
        $region17: #{tpu_custom_call.1} parent=11 // pred_check
          %p146 = pneg %p97
        $region18: #{tpu_custom_call.1} parent=11 // pred_check_branch
          %148 = sbr.rel (%p146) target = $region20
        $region19: #{tpu_custom_call.1} parent=11 // pred_region
          _
        $region20: #{tpu_custom_call.1} parent=11 // pred_fallthru
          _
      $region12: #{tpu_custom_call.1} parent=5 // pred_fallthru
        _
      %p149 = scmp.lt.s32.totalorder %s10, 4
      // Predicated region
      $region21: #{tpu_custom_call.1} parent=5 // pred_check
        %p150 = pneg %p149
      $region22: #{tpu_custom_call.1} parent=5 // pred_check_branch
        %152 = sbr.rel (%p150) target = $region24
      $region23: #{tpu_custom_call.1} parent=5 // pred_region
        // Predicated region
        $region25: #{tpu_custom_call.1} parent=23 // pred_check
          %p153 = pneg %p44
        $region26: #{tpu_custom_call.1} parent=23 // pred_check_branch
          %155 = sbr.rel (%p153) target = $region28
        $region27: #{tpu_custom_call.1} parent=23 // pred_region
          %s156 = smul.u32 8, %s17
          %s157 = smul.u32 2, %s18
          %s158 = ssub.s32 25, %s156
          %p159 = scmp.lt.s32.totalorder %s158, 8
          %s160 = scalar_select %p159, %s158, 8
          %s161 = smul.u32 128, %s160
          %s162 = smul.u32 %s161, 2
          %p163 = scmp.lt.s32.totalorder %s156, 24
          %s164 = scalar_select %p163, %s156, 24
          %p165 = scmp.lt.s32.totalorder %s157, 1
          %s166 = scalar_select %p165, %s157, 1
          %s167 = smul.addr %s164, 2
          %s168 = sadd.s32 %s166, %s167
          %s169 = smul.addr %s168, 8
          %s170 = scalar_lea.vmem %s0, %s169
          %s171 = smul.u32 8, %s17
          %s172 = smul.u32 2, %s18
          %s173 = ssub.s32 25, %s171
          %p174 = scmp.lt.s32.totalorder %s173, 8
          %s175 = scalar_select %p174, %s173, 8
          %s176 = smul.u32 128, %s175
          %s177 = smul.u32 %s176, 2
        $region28: #{tpu_custom_call.1} parent=23 // pred_fallthru
          _
      $region24: #{tpu_custom_call.1} parent=5 // pred_fallthru
        _
      %p178 = scmp.le.s32.totalorder 1, %s10
      %p179 = scmp.lt.s32.totalorder %s10, 5
      %p180 = pnand %p178, %p179
      %p181 = pneg %p180
      // Predicated region
      $region29: #{tpu_custom_call.1} parent=5 // pred_check
        _
      $region30: #{tpu_custom_call.1} parent=5 // pred_check_branch
        %183 = sbr.rel (%p180) target = $region32
      $region31: #{tpu_custom_call.1} parent=5 // pred_region
        %s184 = ssub.s32 %s10, 1
        %s185 = smul.u32 8, %s19
        %s186 = smul.u32 2, %s20
        %s187 = ssub.s32 25, %s185
        %p188 = scmp.lt.s32.totalorder %s187, 8
        %s189 = scalar_select %p188, %s187, 8
        %s190 = smul.u32 128, %s189
        %s191 = smul.u32 %s190, 2
        %p192 = scmp.lt.s32.totalorder %s185, 24
        %s193 = scalar_select %p192, %s185, 24
        %p194 = scmp.lt.s32.totalorder %s186, 1
        %s195 = scalar_select %p194, %s186, 1
        %s196 = smul.addr %s193, 2
        %s197 = sadd.s32 %s195, %s196
        %s198 = smul.addr %s197, 8
        %s199 = scalar_lea.vmem %s0, %s198
        %p200 = pneg %p50
        %p201 = pneg %p47
        %s202 = smul.u32 2, %s20
        %p203 = scmp.lt.s32.totalorder %s202, 1
        %s204 = scalar_select %p203, %s202, 1
        %s205 = scalar_lea.vmem %s1, %s204
        %p206 = pneg %p76
        %p207 = pneg %p73
        %p208 = pneg %p97
        %p209 = pneg %p94
        %p210 = pneg %p123
        %p211 = pneg %p120
        %s212 = sand.u32 %s110, 1
        %s213 = sand.u32 %s110, 1
        %s214 = smul.addr %s213, 64
        %s215 = scalar_lea.vmem [#allocation4], %s214
        %s216 = smul.u32 8, %s19
        %s217 = smul.u32 2, %s20
        %s218 = ssub.s32 25, %s216
        %p219 = scmp.lt.s32.totalorder %s218, 8
        %s220 = scalar_select %p219, %s218, 8
        %s221 = smul.u32 128, %s220
        %s222 = smul.u32 %s221, 2
        %p223 = scmp.lt.s32.totalorder %s216, 24
        %s224 = scalar_select %p223, %s216, 24
        %p225 = scmp.lt.s32.totalorder %s217, 1
        %s226 = scalar_select %p225, %s217, 1
        %s227 = smul.addr %s224, 2
        %s228 = sadd.s32 %s226, %s227
        %s229 = smul.addr %s228, 8
        %s230 = scalar_lea.vmem %s0, %s229
        %s231 = smul.u32 8, %s19
        %s232 = smul.u32 2, %s20
        %s233 = ssub.s32 25, %s231
        %p234 = scmp.lt.s32.totalorder %s233, 8
        %s235 = scalar_select %p234, %s233, 8
        %s236 = smul.u32 128, %s235
        %s237 = smul.u32 %s236, 2
        %s238 = smul.u32 2, %s20
        %p239 = scmp.lt.s32.totalorder %s238, 1
        %s240 = scalar_select %p239, %s238, 1
        %s241 = scalar_lea.vmem %s1, %s240
        %s242 = smul.u32 2, %s20
        %s243 = smul.u32 8, %s19
        %s244 = ssub.s32 25, %s243
        %p245 = scmp.lt.s32.totalorder %s244, 8
        %s246 = scalar_select %p245, %s244, 8
        %s247 = smul.u32 128, %s246
        %p248 = scmp.eq.s32.totalorder %s20, 0
        // Predicated region
        $region33: #{tpu_custom_call.1} parent=31 // pred_check
          %p249 = pneg %p248
        $region34: #{tpu_custom_call.1} parent=31 // pred_check_branch
          %251 = sbr.rel (%p249) target = $region36
        $region35: #{tpu_custom_call.1} parent=31 // pred_region
          %vm252 = vcmask 7168
          %253 = vst.msk [vmem:[#allocation2] sm:$0xff] %vm252, 0.0
          %254 = vst.msk [vmem:[#allocation2 + $0x8] sm:$0xff] %vm252, 0.0
          %255 = vst.msk [vmem:[#allocation2 + $0x10] sm:$0xff] %vm252, 0.0
          %256 = vst.msk [vmem:[#allocation2 + $0x18] sm:$0xff] %vm252, 0.0
          %257 = vst.msk [vmem:[#allocation2 + $0x20] sm:$0xff] %vm252, 0.0
          %258 = vst.msk [vmem:[#allocation2 + $0x28] sm:$0xff] %vm252, 0.0
          %259 = vst.msk [vmem:[#allocation2 + $0x30] sm:$0xff] %vm252, 0.0
          %260 = vst.msk [vmem:[#allocation2 + $0x38] sm:$0xff] %vm252, 0.0
        $region36: #{tpu_custom_call.1} parent=31 // pred_fallthru
          _
        %v261 = vld [vmem:[%s230] sm:$0xff]
        %v262 = vld [vmem:[%s230 + $0x8] sm:$0xff]
        %v263 = vld [vmem:[%s230 + $0x10] sm:$0xff]
        %v264 = vld [vmem:[%s230 + $0x18] sm:$0xff]
        %v265 = vld [vmem:[%s230 + $0x20] sm:$0xff]
        %v266 = vld [vmem:[%s230 + $0x28] sm:$0xff]
        %v267 = vld [vmem:[%s230 + $0x30] sm:$0xff]
        %v268 = vld [vmem:[%s230 + $0x38] sm:$0xff]
        %v269 = vld [vmem:[%s230 + $0x40] sm:$0xff]
        %v270 = vld [vmem:[%s230 + $0x48] sm:$0xff]
        %v271 = vld [vmem:[%s230 + $0x50] sm:$0xff]
        %v272 = vld [vmem:[%s230 + $0x58] sm:$0xff]
        %v273 = vld [vmem:[%s230 + $0x60] sm:$0xff]
        %v274 = vld [vmem:[%s230 + $0x68] sm:$0xff]
        %v275 = vld [vmem:[%s230 + $0x70] sm:$0xff]
        %v276 = vld [vmem:[%s230 + $0x78] sm:$0xff]
        %v277 = vld [vmem:[%s241] sm:$0x3]
        %v278 = vld [vmem:[#allocation2] sm:$0xff]
        %v279 = vld [vmem:[#allocation2 + $0x8] sm:$0xff]
        %v280 = vld [vmem:[#allocation2 + $0x10] sm:$0xff]
        %v281 = vld [vmem:[#allocation2 + $0x18] sm:$0xff]
        %v282 = vld [vmem:[#allocation2 + $0x20] sm:$0xff]
        %v283 = vld [vmem:[#allocation2 + $0x28] sm:$0xff]
        %v284 = vld [vmem:[#allocation2 + $0x30] sm:$0xff]
        %v285 = vld [vmem:[#allocation2 + $0x38] sm:$0xff]
        %v287 = vlaneseq
        %v288 = vshrl.u32 %v287, 7
        %v289 = vsub.s32 0, %v288
        %v290 = vrot.slane %v277, %v289
        %v291 = vlaneseq
        %v292 = vshrl.u32 %v291, 7
        %v293 = vsub.s32 1, %v292
        %v294 = vrot.slane %v277, %v293
        %v297 = vmul.f32 %v261, %v290
        %v298 = vmul.f32 %v262, %v294
        %v299 = vmul.f32 %v263, %v290
        %v300 = vmul.f32 %v264, %v294
        %v301 = vmul.f32 %v265, %v290
        %v302 = vmul.f32 %v266, %v294
        %v303 = vmul.f32 %v267, %v290
        %v304 = vmul.f32 %v268, %v294
        %v305 = vmul.f32 %v269, %v290
        %v306 = vmul.f32 %v270, %v294
        %v307 = vmul.f32 %v271, %v290
        %v308 = vmul.f32 %v272, %v294
        %v309 = vmul.f32 %v273, %v290
        %v310 = vmul.f32 %v274, %v294
        %v311 = vmul.f32 %v275, %v290
        %v312 = vmul.f32 %v276, %v294
        %vm313 = vcmask 261120
        %v314 = vsel %vm313, %v298, 0.0
        %v315 = vadd.f32 %v297, %v314
        %316 = vadd.xlane.f32.xlu0 %v315
        %v317 = vpop.xlane.xlu0 %316
        %v318 = vsel %vm313, %v300, 0.0
        %v319 = vadd.f32 %v299, %v318
        %320 = vadd.xlane.f32.xlu0 %v319
        %v321 = vpop.xlane.xlu0 %320
        %v322 = vsel %vm313, %v302, 0.0
        %v323 = vadd.f32 %v301, %v322
        %324 = vadd.xlane.f32.xlu0 %v323
        %v325 = vpop.xlane.xlu0 %324
        %v326 = vsel %vm313, %v304, 0.0
        %v327 = vadd.f32 %v303, %v326
        %328 = vadd.xlane.f32.xlu0 %v327
        %v329 = vpop.xlane.xlu0 %328
        %v330 = vsel %vm313, %v306, 0.0
        %v331 = vadd.f32 %v305, %v330
        %332 = vadd.xlane.f32.xlu0 %v331
        %v333 = vpop.xlane.xlu0 %332
        %v334 = vsel %vm313, %v308, 0.0
        %v335 = vadd.f32 %v307, %v334
        %336 = vadd.xlane.f32.xlu0 %v335
        %v337 = vpop.xlane.xlu0 %336
        %v338 = vsel %vm313, %v310, 0.0
        %v339 = vadd.f32 %v309, %v338
        %340 = vadd.xlane.f32.xlu0 %v339
        %v341 = vpop.xlane.xlu0 %340
        %v342 = vsel %vm313, %v312, 0.0
        %v343 = vadd.f32 %v311, %v342
        %344 = vadd.xlane.f32.xlu0 %v343
        %v345 = vpop.xlane.xlu0 %344
        %v346 = vadd.f32 %v278, %v317
        %v347 = vadd.f32 %v279, %v321
        %v348 = vadd.f32 %v280, %v325
        %v349 = vadd.f32 %v281, %v329
        %v350 = vadd.f32 %v282, %v333
        %v351 = vadd.f32 %v283, %v337
        %v352 = vadd.f32 %v284, %v341
        %v353 = vadd.f32 %v285, %v345
        %vm354 = vcmask 7168
        %355 = vst.msk [vmem:[#allocation2] sm:$0xff] %vm354, %v346
        %356 = vst.msk [vmem:[#allocation2 + $0x8] sm:$0xff] %vm354, %v347
        %357 = vst.msk [vmem:[#allocation2 + $0x10] sm:$0xff] %vm354, %v348
        %358 = vst.msk [vmem:[#allocation2 + $0x18] sm:$0xff] %vm354, %v349
        %359 = vst.msk [vmem:[#allocation2 + $0x20] sm:$0xff] %vm354, %v350
        %360 = vst.msk [vmem:[#allocation2 + $0x28] sm:$0xff] %vm354, %v351
        %361 = vst.msk [vmem:[#allocation2 + $0x30] sm:$0xff] %vm354, %v352
        %362 = vst.msk [vmem:[#allocation2 + $0x38] sm:$0xff] %vm354, %v353
        // Predicated region
        $region37: #{tpu_custom_call.1} parent=31 // pred_check
          %p363 = pneg %p248
        $region38: #{tpu_custom_call.1} parent=31 // pred_check_branch
          %365 = sbr.rel (%p363) target = $region40
        $region39: #{tpu_custom_call.1} parent=31 // pred_region
          %v366 = vld [vmem:[#allocation2] sm:$0xff]
          %v367 = vld [vmem:[#allocation2 + $0x8] sm:$0xff]
          %v368 = vld [vmem:[#allocation2 + $0x10] sm:$0xff]
          %v369 = vld [vmem:[#allocation2 + $0x18] sm:$0xff]
          %v370 = vld [vmem:[#allocation2 + $0x20] sm:$0xff]
          %v371 = vld [vmem:[#allocation2 + $0x28] sm:$0xff]
          %v372 = vld [vmem:[#allocation2 + $0x30] sm:$0xff]
          %v373 = vld [vmem:[#allocation2 + $0x38] sm:$0xff]
          %s374 = sld [smem:[#allocation3]]
          %v375 = vstv %s374
          %v376 = vadd.f32 %v366, %v375
          %v377 = vadd.f32 %v367, %v375
          %v378 = vadd.f32 %v368, %v375
          %v379 = vadd.f32 %v369, %v375
          %v380 = vadd.f32 %v370, %v375
          %v381 = vadd.f32 %v371, %v375
          %v382 = vadd.f32 %v372, %v375
          %v383 = vadd.f32 %v373, %v375
          %384 = vst.msk [vmem:[%s215] sm:$0xff] %vm354, %v376
          %385 = vst.msk [vmem:[%s215 + $0x8] sm:$0xff] %vm354, %v377
          %386 = vst.msk [vmem:[%s215 + $0x10] sm:$0xff] %vm354, %v378
          %387 = vst.msk [vmem:[%s215 + $0x18] sm:$0xff] %vm354, %v379
          %388 = vst.msk [vmem:[%s215 + $0x20] sm:$0xff] %vm354, %v380
          %389 = vst.msk [vmem:[%s215 + $0x28] sm:$0xff] %vm354, %v381
          %390 = vst.msk [vmem:[%s215 + $0x30] sm:$0xff] %vm354, %v382
          %391 = vst.msk [vmem:[%s215 + $0x38] sm:$0xff] %vm354, %v383
        $region40: #{tpu_custom_call.1} parent=31 // pred_fallthru
          _
        %s392 = sand.u32 %s110, 1
        %s393 = sand.u32 %s110, 1
        %s394 = smul.addr %s393, 64
        %s395 = scalar_lea.vmem [#allocation4], %s394
        // Predicated region
        $region41: #{tpu_custom_call.1} parent=31 // pred_check
          %p396 = pneg %p120
        $region42: #{tpu_custom_call.1} parent=31 // pred_check_branch
          %398 = sbr.rel (%p396) target = $region44
        $region43: #{tpu_custom_call.1} parent=31 // pred_region
          %s399 = smul.u32 8, %s19
          %s400 = ssub.s32 25, %s399
          %p401 = scmp.lt.s32.totalorder %s400, 8
          %s402 = scalar_select %p401, %s400, 8
          %s403 = smul.u32 128, %s402
          %p404 = scmp.ne.s32.totalorder 0, %s403
          %s405 = smul.addr %s399, 8
          %s406 = scalar_lea.vmem %s3, %s405
          // Predicated region
          $region45: #{tpu_custom_call.1} parent=43 // pred_check
            %p407 = pneg %p404
          $region46: #{tpu_custom_call.1} parent=43 // pred_check_branch
            %409 = sbr.rel (%p407) target = $region48
          $region47: #{tpu_custom_call.1} parent=43 // pred_region
            // Predicated region
            $region49: #{tpu_custom_call.1} parent=47 // pred_check
              _
            $region50: #{tpu_custom_call.1} parent=47 // pred_check_branch
              %411 = sbr.rel (0) target = $region52
            $region51: #{tpu_custom_call.1} parent=47 // pred_region
              // Predicated region
              $region71: #{tpu_custom_call.1} parent=51 // pred_check
                _
              $region72: #{tpu_custom_call.1} parent=51 // pred_check_branch
                %475 = sbr.rel (0) target = $region74
              $region73: #{tpu_custom_call.1} parent=51 // pred_region
                %s476 = sshrl.u32 %s402, 3
                // While loop
                $region75: #{tpu_custom_call.1} parent=73 // loop_pre_header
                  _
                $region76: #{tpu_custom_call.1} parent=73 // loop_header
                  %s478 = sphi 0, %s480
                  %p479 = scmp.ge.s32.totalorder %s478, %s476
                  %s483 = sphi 0, %s504
                  %s484 = sphi %s395, %s507
                  %s485 = sphi %s406, %s508
                $region77: #{tpu_custom_call.1} parent=73 // loop_header_branch
                  %482 = sbr.rel (%p479) target = $region81
                $region78: #{tpu_custom_call.1} parent=73 // loop_body
                  %v486 = vld [vmem:[%s484] sm:$0xff]
                  %487 = vst [vmem:[%s485] sm:$0xff] %v486
                  %v488 = vld [vmem:[%s484 + $0x8] sm:$0xff]
                  %489 = vst [vmem:[%s485 + $0x8] sm:$0xff] %v488
                  %v490 = vld [vmem:[%s484 + $0x10] sm:$0xff]
                  %491 = vst [vmem:[%s485 + $0x10] sm:$0xff] %v490
                  %v492 = vld [vmem:[%s484 + $0x18] sm:$0xff]
                  %493 = vst [vmem:[%s485 + $0x18] sm:$0xff] %v492
                  %v494 = vld [vmem:[%s484 + $0x20] sm:$0xff]
                  %495 = vst [vmem:[%s485 + $0x20] sm:$0xff] %v494
                  %v496 = vld [vmem:[%s484 + $0x28] sm:$0xff]
                  %497 = vst [vmem:[%s485 + $0x28] sm:$0xff] %v496
                  %v498 = vld [vmem:[%s484 + $0x30] sm:$0xff]
                  %499 = vst [vmem:[%s485 + $0x30] sm:$0xff] %v498
                  %v500 = vld [vmem:[%s484 + $0x38] sm:$0xff]
                  %501 = vst [vmem:[%s485 + $0x38] sm:$0xff] %v500
                  %s502 = sadd.s32 1, %s483
                  %p503 = scmp.ge.s32.totalorder %s502, %s476
                  %s504 = scalar_select %p503, 0, %s502
                  %s505 = smul.u32 %s504, 64
                  %s506 = smul.u32 %s504, 64
                  %s507 = scalar_lea.vmem %s395, %s505 [#allocation4]
                  %s508 = scalar_lea.vmem %s406, %s506
                $region79: #{tpu_custom_call.1} parent=73 // loop_footer
                  %s480 = sadd.s32 %s478, 1
                $region80: #{tpu_custom_call.1} parent=73 // loop_footer_branch
                  %477 = sbr.rel target = $region76
                $region81: #{tpu_custom_call.1} parent=73 // loop_exit
                  _
                %s509 = sshrl.u32 %s402, 3
                %s510 = sand.u32 %s402, 7
                %s511 = smul.u32 %s509, 8
                %s512 = smul.u32 8, %s511
                %s513 = scalar_lea.vmem %s395, %s512 [#allocation4]
                %s514 = smul.u32 8, %s511
                %s515 = scalar_lea.vmem %s406, %s514
                // While loop
                $region82: #{tpu_custom_call.1} parent=73 // loop_pre_header
                  _
                $region83: #{tpu_custom_call.1} parent=73 // loop_header
                  %s517 = sphi 0, %s519
                  %p518 = scmp.ge.s32.totalorder %s517, %s510
                  %s522 = sphi 0, %s529
                  %s523 = sphi %s513, %s532
                  %s524 = sphi %s515, %s533
                $region84: #{tpu_custom_call.1} parent=73 // loop_header_branch
                  %521 = sbr.rel (%p518) target = $region88
                $region85: #{tpu_custom_call.1} parent=73 // loop_body
                  %v525 = vld [vmem:[%s523] sm:$0xff]
                  %526 = vst [vmem:[%s524] sm:$0xff] %v525
                  %s527 = sadd.s32 1, %s522
                  %p528 = scmp.ge.s32.totalorder %s527, %s510
                  %s529 = scalar_select %p528, 0, %s527
                  %s530 = smul.u32 %s529, 8
                  %s531 = smul.u32 %s529, 8
                  %s532 = scalar_lea.vmem %s513, %s530 [#allocation4]
                  %s533 = scalar_lea.vmem %s515, %s531
                $region86: #{tpu_custom_call.1} parent=73 // loop_footer
                  %s519 = sadd.s32 %s517, 1
                $region87: #{tpu_custom_call.1} parent=73 // loop_footer_branch
                  %516 = sbr.rel target = $region83
                $region88: #{tpu_custom_call.1} parent=73 // loop_exit
                  _
              $region74: #{tpu_custom_call.1} parent=51 // pred_fallthru
                _
              // Predicated region
              $region89: #{tpu_custom_call.1} parent=51 // pred_check
                _
              $region90: #{tpu_custom_call.1} parent=51 // pred_check_branch
                %535 = sbr.rel target = $region92
              $region91: #{tpu_custom_call.1} parent=51 // pred_region
                _
              $region92: #{tpu_custom_call.1} parent=51 // pred_fallthru
                _
            $region52: #{tpu_custom_call.1} parent=47 // pred_fallthru
              _
            // Predicated region
            $region53: #{tpu_custom_call.1} parent=47 // pred_check
              _
            $region54: #{tpu_custom_call.1} parent=47 // pred_check_branch
              %413 = sbr.rel target = $region56
            $region55: #{tpu_custom_call.1} parent=47 // pred_region
              %s415 = ssub.s32 256, 1
              %s416 = sshrl.u32 %s402, 3
              // While loop
              $region57: #{tpu_custom_call.1} parent=55 // loop_pre_header
                _
              $region58: #{tpu_custom_call.1} parent=55 // loop_header
                %s418 = sphi 0, %s420
                %p419 = scmp.ge.s32.totalorder %s418, %s416
                %s423 = sphi 0, %s444
                %s424 = sphi %s395, %s447
                %s425 = sphi %s406, %s448
              $region59: #{tpu_custom_call.1} parent=55 // loop_header_branch
                %422 = sbr.rel (%p419) target = $region63
              $region60: #{tpu_custom_call.1} parent=55 // loop_body
                %v426 = vld [vmem:[%s424] sm:%s415]
                %427 = vst [vmem:[%s425] sm:%s415] %v426
                %v428 = vld [vmem:[%s424 + $0x8] sm:%s415]
                %429 = vst [vmem:[%s425 + $0x8] sm:%s415] %v428
                %v430 = vld [vmem:[%s424 + $0x10] sm:%s415]
                %431 = vst [vmem:[%s425 + $0x10] sm:%s415] %v430
                %v432 = vld [vmem:[%s424 + $0x18] sm:%s415]
                %433 = vst [vmem:[%s425 + $0x18] sm:%s415] %v432
                %v434 = vld [vmem:[%s424 + $0x20] sm:%s415]
                %435 = vst [vmem:[%s425 + $0x20] sm:%s415] %v434
                %v436 = vld [vmem:[%s424 + $0x28] sm:%s415]
                %437 = vst [vmem:[%s425 + $0x28] sm:%s415] %v436
                %v438 = vld [vmem:[%s424 + $0x30] sm:%s415]
                %439 = vst [vmem:[%s425 + $0x30] sm:%s415] %v438
                %v440 = vld [vmem:[%s424 + $0x38] sm:%s415]
                %441 = vst [vmem:[%s425 + $0x38] sm:%s415] %v440
                %s442 = sadd.s32 1, %s423
                %p443 = scmp.ge.s32.totalorder %s442, %s416
                %s444 = scalar_select %p443, 0, %s442
                %s445 = smul.u32 %s444, 64
                %s446 = smul.u32 %s444, 64
                %s447 = scalar_lea.vmem %s395, %s445 [#allocation4]
                %s448 = scalar_lea.vmem %s406, %s446
              $region61: #{tpu_custom_call.1} parent=55 // loop_footer
                %s420 = sadd.s32 %s418, 1
              $region62: #{tpu_custom_call.1} parent=55 // loop_footer_branch
                %417 = sbr.rel target = $region58
              $region63: #{tpu_custom_call.1} parent=55 // loop_exit
                _
              %s449 = sshrl.u32 %s402, 3
              %s450 = sand.u32 %s402, 7
              %s451 = smul.u32 %s449, 8
              %s452 = smul.u32 8, %s451
              %s453 = scalar_lea.vmem %s395, %s452 [#allocation4]
              %s454 = smul.u32 8, %s451
              %s455 = scalar_lea.vmem %s406, %s454
              // While loop
              $region64: #{tpu_custom_call.1} parent=55 // loop_pre_header
                _
              $region65: #{tpu_custom_call.1} parent=55 // loop_header
                %s457 = sphi 0, %s459
                %p458 = scmp.ge.s32.totalorder %s457, %s450
                %s462 = sphi 0, %s469
                %s463 = sphi %s453, %s472
                %s464 = sphi %s455, %s473
              $region66: #{tpu_custom_call.1} parent=55 // loop_header_branch
                %461 = sbr.rel (%p458) target = $region70
              $region67: #{tpu_custom_call.1} parent=55 // loop_body
                %v465 = vld [vmem:[%s463] sm:%s415]
                %466 = vst [vmem:[%s464] sm:%s415] %v465
                %s467 = sadd.s32 1, %s462
                %p468 = scmp.ge.s32.totalorder %s467, %s450
                %s469 = scalar_select %p468, 0, %s467
                %s470 = smul.u32 %s469, 8
                %s471 = smul.u32 %s469, 8
                %s472 = scalar_lea.vmem %s453, %s470 [#allocation4]
                %s473 = scalar_lea.vmem %s455, %s471
              $region68: #{tpu_custom_call.1} parent=55 // loop_footer
                %s459 = sadd.s32 %s457, 1
              $region69: #{tpu_custom_call.1} parent=55 // loop_footer_branch
                %456 = sbr.rel target = $region65
              $region70: #{tpu_custom_call.1} parent=55 // loop_exit
                _
            $region56: #{tpu_custom_call.1} parent=47 // pred_fallthru
              _
          $region48: #{tpu_custom_call.1} parent=43 // pred_fallthru
            _
          %536 = vnop
        $region44: #{tpu_custom_call.1} parent=31 // pred_fallthru
          _
      $region32: #{tpu_custom_call.1} parent=5 // pred_fallthru
        _
      %p537 = scmp.le.s32.totalorder 2, %s10
      // Predicated region
      $region93: #{tpu_custom_call.1} parent=5 // pred_check
        %p538 = pneg %p537
      $region94: #{tpu_custom_call.1} parent=5 // pred_check_branch
        %540 = sbr.rel (%p538) target = $region96
      $region95: #{tpu_custom_call.1} parent=5 // pred_region
        %s541 = ssub.s32 %s10, 2
        // Predicated region
        $region97: #{tpu_custom_call.1} parent=95 // pred_check
          %p542 = pneg %p126
        $region98: #{tpu_custom_call.1} parent=95 // pred_check_branch
          %544 = sbr.rel (%p542) target = $region100
        $region99: #{tpu_custom_call.1} parent=95 // pred_region
          %s545 = sand.u32 %s111, 1
          %s546 = sand.u32 %s111, 1
          %s547 = smul.addr %s546, 64
          %s548 = scalar_lea.vmem [#allocation4], %s547
        $region100: #{tpu_custom_call.1} parent=95 // pred_fallthru
          _
      $region96: #{tpu_custom_call.1} parent=5 // pred_fallthru
        _
    $region6: #{tpu_custom_call.1} parent=1 // loop_footer
      %s14 = sadd.s32 1, %s10
    $region7: #{tpu_custom_call.1} parent=1 // loop_footer_branch
      %9 = sbr.rel target = $region3
    $region8: #{tpu_custom_call.1} parent=1 // loop_exit
      _

</llo_original>
